<compile_context>
chip_gen: v6e
topology: v6e:2x2x1
jax: 0.10.0
libtpu: 0.0.40
codegen_flags: <defaults>
</compile_context>

<pallas_src>
import functools

import jax
import jax.numpy as jnp
from jax import lax
from jax.experimental import pallas as pl
from jax.experimental.pallas import tpu as pltpu

_F32_NEG = float(jnp.finfo(jnp.float32).min)


def _round_up(x, m):
    return ((x + m - 1) // m) * m


def _cce_kernel(x_ref, o_ref,
                m_r, s_r, m_c, s_c, row_acc, col_acc, tr_acc,
                *, n_valid, tm, tn, padded):
    i = pl.program_id(0)          # row strip
    j = pl.program_id(1)          # column tile (inner axis)
    ni = pl.num_programs(0)
    nj = pl.num_programs(1)

    # ---- one-time global accumulator init ----
    @pl.when(jnp.logical_and(i == 0, j == 0))
    def _init_acc():
        row_acc[...] = jnp.zeros_like(row_acc)
        col_acc[...] = jnp.zeros_like(col_acc)
        tr_acc[...] = jnp.zeros_like(tr_acc)

    # ---- per-row-strip init of the online row-LSE state ----
    @pl.when(j == 0)
    def _init_row_state():
        m_r[...] = jnp.full_like(m_r, _F32_NEG)
        s_r[...] = jnp.zeros_like(s_r)

    # ---- per-column-tile init of the online column-LSE state ----
    @pl.when(i == 0)
    def _init_col_state():
        m_c[j] = jnp.full((1, tn), _F32_NEG, jnp.float32)
        s_c[j] = jnp.zeros((1, tn), jnp.float32)

    x = x_ref[...]                          # [tm, tn] native dtype (bf16/f32)
    x32 = x.astype(jnp.float32)             # single tile-sized widened copy

    r0 = i * tm
    c0 = j * tn

    # ---- trace contribution, only on tiles crossing the diagonal ----
    @pl.when(jnp.logical_and(r0 < c0 + tn, c0 < r0 + tm))
    def _trace():
        # diag element in this tile: (row r, col c) with r0 + r == c0 + c
        rows = lax.broadcasted_iota(jnp.int32, (tm, 1), 0) + (r0 - c0)   # [tm, 1]
        cols = lax.broadcasted_iota(jnp.int32, (1, tn), 1)               # [1, tn]
        dmask = rows == cols                                             # [tm, tn]
        if padded:
            row_ids = lax.broadcasted_iota(jnp.int32, (tm, 1), 0) + r0
            dmask = jnp.logical_and(dmask, row_ids < n_valid)
        tr_acc[...] += jnp.sum(jnp.where(dmask, x32, 0.0))

    # ---- online row logsumexp, carried across the j (column-tile) axis ----
    m_tile_r = jnp.max(x, axis=1, keepdims=True).astype(jnp.float32)     # [tm, 1]
    m_new_r = jnp.maximum(m_r[...], m_tile_r)
    e_r = jnp.exp(x32 - m_new_r)                                         # [tm, tn]
    s_r[...] = s_r[...] * jnp.exp(m_r[...] - m_new_r) \
        + jnp.sum(e_r, axis=1, keepdims=True)
    m_r[...] = m_new_r

    # ---- online column logsumexp, carried across the i (row-strip) axis ----
    m_prev_c = m_c[j]                                                    # [1, tn]
    m_tile_c = jnp.max(x, axis=0, keepdims=True).astype(jnp.float32)     # [1, tn]
    m_new_c = jnp.maximum(m_prev_c, m_tile_c)
    e_c = jnp.exp(x32 - m_new_c)                                         # [tm, tn]
    s_new_c = s_c[j] * jnp.exp(m_prev_c - m_new_c) \
        + jnp.sum(e_c, axis=0, keepdims=True)
    m_c[j] = m_new_c
    s_c[j] = s_new_c

    # ---- row-LSE finalize at the last column tile of this strip ----
    @pl.when(j == nj - 1)
    def _fin_rows():
        lse_r = m_r[...] + jnp.log(s_r[...])                             # [tm, 1]
        if padded:
            row_ids = lax.broadcasted_iota(jnp.int32, (tm, 1), 0) + r0
            lse_r = jnp.where(row_ids < n_valid, lse_r, 0.0)
        row_acc[...] += jnp.sum(lse_r)

    # ---- column-LSE finalize on the last row strip ----
    @pl.when(i == ni - 1)
    def _fin_cols():
        lse_c = m_new_c + jnp.log(s_new_c)                               # [1, tn]
        if padded:
            col_ids = lax.broadcasted_iota(jnp.int32, (1, tn), 1) + c0
            lse_c = jnp.where(col_ids < n_valid, lse_c, 0.0)
        col_acc[...] += jnp.sum(lse_c)

    # ---- emit the scalar loss on the final grid step (lane-dense VMEM scalar) ----
    @pl.when(jnp.logical_and(i == ni - 1, j == nj - 1))
    def _emit():
        inv_n = 1.0 / n_valid
        o_ref[...] = (0.5 * (row_acc[...] + col_acc[...]) - tr_acc[...]) * inv_n


def _vmem_limit_bytes():
    # Per-generation VMEM grant: <= ~40 MiB on v7x (64 MiB physical per TC),
    # up to 80 MiB on v5e/v6e (128 MiB physical).
    try:
        cap = int(pltpu.get_tpu_info().vmem_capacity_bytes)
    except Exception:
        cap = 64 * 1024 * 1024
    return min((cap * 5) // 8, 80 * 1024 * 1024)


def contrastive_cross_entropy(pairwise_embedding, *, max_tile_m=1024, max_tile_n=1024):
    n = pairwise_embedding.shape[0]
    assert pairwise_embedding.ndim == 2 and pairwise_embedding.shape[1] == n, \
        "expects a square [N, N] logits matrix"

    x = pairwise_embedding
    if not jnp.issubdtype(x.dtype, jnp.floating):
        x = x.astype(jnp.float32)
    # NOTE: no host-side up-cast -- the HBM->VMEM DMA moves the native width.

    itemsize = jnp.dtype(x.dtype).itemsize
    np_dim = _round_up(n, 128)                  # pad only to lane granularity

    vmem_limit = _vmem_limit_bytes()

    # Column tile: largest candidate (multiple of 128) dividing the padded extent.
    tn = 128
    for cand in (1024, 512, 384, 256, 128):
        if cand <= max_tile_n and np_dim % cand == 0:
            tn = cand
            break

    # Persistent column online state (m + s), sublane-padded to 8 rows.
    col_state_bytes = 2 * (np_dim // tn) * 8 * tn * 4
    margin = 4 * 1024 * 1024                    # row state, accumulators, compiler scratch
    budget = vmem_limit - col_state_bytes - margin

    # Row strip: largest candidate dividing the padded extent that fits the budget
    # (2 double-buffered native tiles + ~4 f32 working tiles per grid step).
    tm = 128
    for cand in (1024, 512, 384, 256, 128):
        if cand <= max_tile_m and np_dim % cand == 0 \
                and cand * tn * (2 * itemsize + 16) <= budget:
            tm = cand
            break

    padded = np_dim != n
    if padded:
        pad = np_dim - n
        pad_val = float(jnp.finfo(x.dtype).min)
        x = jnp.pad(x, ((0, pad), (0, pad)), constant_values=pad_val)

    n_row_strips = np_dim // tm
    n_col_tiles = np_dim // tn

    kernel = functools.partial(_cce_kernel, n_valid=n, tm=tm, tn=tn, padded=padded)

    out = pl.pallas_call(
        kernel,
        out_shape=jax.ShapeDtypeStruct((1, 1), jnp.float32),
        grid_spec=pltpu.PrefetchScalarGridSpec(
            num_scalar_prefetch=0,
            grid=(n_row_strips, n_col_tiles),
            in_specs=[pl.BlockSpec((tm, tn), lambda i, j: (i, j))],
            out_specs=pl.BlockSpec((1, 1), lambda i, j: (0, 0)),
            scratch_shapes=[
                pltpu.VMEM((tm, 1), jnp.float32),               # row running max
                pltpu.VMEM((tm, 1), jnp.float32),               # row running exp-sum
                pltpu.VMEM((n_col_tiles, 1, tn), jnp.float32),  # column running max
                pltpu.VMEM((n_col_tiles, 1, tn), jnp.float32),  # column running exp-sum
                pltpu.VMEM((1, 1), jnp.float32),                # sum of row LSEs
                pltpu.VMEM((1, 1), jnp.float32),                # sum of column LSEs
                pltpu.VMEM((1, 1), jnp.float32),                # trace accumulator
            ],
        ),
        compiler_params=pltpu.CompilerParams(
            # Both axes carry online state / accumulators -> must stay sequential.
            dimension_semantics=("arbitrary", "arbitrary"),
            vmem_limit_bytes=vmem_limit,
        ),
    )(x)
    return out[0, 0]


def _reference(pairwise_embedding):
    x = pairwise_embedding.astype(jnp.float32)
    diag = jnp.diagonal(x)
    lse_r = jax.nn.logsumexp(x, axis=1)
    lse_c = jax.nn.logsumexp(x, axis=0)
    return (jnp.mean(lse_r - diag) + jnp.mean(lse_c - diag)) / 2.0


if __name__ == "__main__":
    key = jax.random.PRNGKey(0)
    k1, k2, k3 = jax.random.split(key, 3)

    # Small f32 case (N=16 -> single padded 128x128 tile).
    pw_f32 = jax.random.normal(k1, (16, 16), dtype=jnp.float32)
    loss = jax.block_until_ready(contrastive_cross_entropy(pw_f32))
    ref = jax.block_until_ready(_reference(pw_f32))
    assert jnp.allclose(loss, ref, rtol=1e-5, atol=1e-5), (loss, ref)

    # bf16 case with N not a multiple of 128 (exercises padding masks and the
    # native-dtype DMA path).
    pw_bf16 = (jax.random.normal(k2, (40, 40), dtype=jnp.float32) * 4.0).astype(jnp.bfloat16)
    loss_b = jax.block_until_ready(contrastive_cross_entropy(pw_bf16))
    ref_b = jax.block_until_ready(_reference(pw_bf16))
    assert jnp.allclose(loss_b, ref_b, rtol=1e-3, atol=1e-3), (loss_b, ref_b)

    # Multi-tile 2-D grid (capped tiles -> 2x2 grid), padded N, large-magnitude
    # logits: exercises the online row/column LSE carries, the diagonal-crossing
    # tile test and the padding masks.
    pw_big = jax.random.normal(k3, (200, 200), dtype=jnp.float32) * 8.0
    loss_g = jax.block_until_ready(
        contrastive_cross_entropy(pw_big, max_tile_m=128, max_tile_n=128))
    ref_g = jax.block_until_ready(_reference(pw_big))
    assert jnp.allclose(loss_g, ref_g, rtol=1e-4, atol=1e-4), (loss_g, ref_g)

    print("KERNEL_OK")
</pallas_src>

<mosaic_0001>
module attributes {stable_mosaic.version = 11 : i64} {
  func.func @_cce_kernel(%arg0: i32, %arg1: i32, %arg2: memref<128x128xf32, #tpu.memory_space<vmem>>, %arg3: memref<1x1xf32, #tpu.memory_space<vmem>>, %arg4: memref<128x1xf32, #tpu.memory_space<vmem>>, %arg5: memref<128x1xf32, #tpu.memory_space<vmem>>, %arg6: memref<1x1x128xf32, #tpu.memory_space<vmem>>, %arg7: memref<1x1x128xf32, #tpu.memory_space<vmem>>, %arg8: memref<1x1xf32, #tpu.memory_space<vmem>>, %arg9: memref<1x1xf32, #tpu.memory_space<vmem>>, %arg10: memref<1x1xf32, #tpu.memory_space<vmem>>) attributes {dimension_semantics = [#tpu.dimension_semantics<arbitrary>, #tpu.dimension_semantics<arbitrary>], iteration_bounds = array<i64: 1, 1>, scalar_prefetch = 0 : i64, scratch_operands = 7 : i64, tpu.core_type = #tpu.core_type<tc>, window_params = [{transform_indices = @transform_0, window_bounds = array<i64: 128, 128>}, {pipeline_mode = #tpu.pipeline_mode<synchronous>, transform_indices = @transform_1, window_bounds = array<i64: 1, 1>}]} {
    %c0_i32 = arith.constant 0 : i32
    %0 = arith.cmpi eq, %arg0, %c0_i32 : i32
    %c0_i32_0 = arith.constant 0 : i32
    %1 = arith.cmpi eq, %arg1, %c0_i32_0 : i32
    %2 = arith.andi %0, %1 : i1
    %3 = arith.extui %2 : i1 to i32
    %c0_i32_1 = arith.constant 0 : i32
    %4 = arith.cmpi ne, %3, %c0_i32_1 : i32
    scf.if %4 {
      %cst_39 = arith.constant 0.000000e+00 : f32
      %75 = vector.broadcast %cst_39 : f32 to vector<1x1xf32>
      %c0_40 = arith.constant 0 : index
      %c0_41 = arith.constant 0 : index
      %76 = vector.load %arg8[%c0_40, %c0_41] : memref<1x1xf32, #tpu.memory_space<vmem>>, vector<1x1xf32>
      tpu.vector_store %arg8[%c0_40, %c0_41], %75 {strides = array<i32>} : memref<1x1xf32, #tpu.memory_space<vmem>>, vector<1x1xf32>,
      %cst_42 = arith.constant 0.000000e+00 : f32
      %77 = vector.broadcast %cst_42 : f32 to vector<1x1xf32>
      %c0_43 = arith.constant 0 : index
      %c0_44 = arith.constant 0 : index
      %78 = vector.load %arg9[%c0_43, %c0_44] : memref<1x1xf32, #tpu.memory_space<vmem>>, vector<1x1xf32>
      tpu.vector_store %arg9[%c0_43, %c0_44], %77 {strides = array<i32>} : memref<1x1xf32, #tpu.memory_space<vmem>>, vector<1x1xf32>,
      %cst_45 = arith.constant 0.000000e+00 : f32
      %79 = vector.broadcast %cst_45 : f32 to vector<1x1xf32>
      %c0_46 = arith.constant 0 : index
      %c0_47 = arith.constant 0 : index
      %80 = vector.load %arg10[%c0_46, %c0_47] : memref<1x1xf32, #tpu.memory_space<vmem>>, vector<1x1xf32>
      tpu.vector_store %arg10[%c0_46, %c0_47], %79 {strides = array<i32>} : memref<1x1xf32, #tpu.memory_space<vmem>>, vector<1x1xf32>,
    } else {
    }
    %c0_i32_2 = arith.constant 0 : i32
    %5 = arith.cmpi eq, %arg1, %c0_i32_2 : i32
    %6 = arith.extui %5 : i1 to i32
    %c0_i32_3 = arith.constant 0 : i32
    %7 = arith.cmpi ne, %6, %c0_i32_3 : i32
    scf.if %7 {
      %cst_39 = arith.constant -3.40282347E+38 : f32
      %75 = vector.broadcast %cst_39 : f32 to vector<128x1xf32>
      %c0_40 = arith.constant 0 : index
      %c0_41 = arith.constant 0 : index
      %76 = vector.load %arg4[%c0_40, %c0_41] : memref<128x1xf32, #tpu.memory_space<vmem>>, vector<128x1xf32>
      tpu.vector_store %arg4[%c0_40, %c0_41], %75 {strides = array<i32>} : memref<128x1xf32, #tpu.memory_space<vmem>>, vector<128x1xf32>,
      %cst_42 = arith.constant 0.000000e+00 : f32
      %77 = vector.broadcast %cst_42 : f32 to vector<128x1xf32>
      %c0_43 = arith.constant 0 : index
      %c0_44 = arith.constant 0 : index
      %78 = vector.load %arg5[%c0_43, %c0_44] : memref<128x1xf32, #tpu.memory_space<vmem>>, vector<128x1xf32>
      tpu.vector_store %arg5[%c0_43, %c0_44], %77 {strides = array<i32>} : memref<128x1xf32, #tpu.memory_space<vmem>>, vector<128x1xf32>,
    } else {
    }
    %c0_i32_4 = arith.constant 0 : i32
    %8 = arith.cmpi eq, %arg0, %c0_i32_4 : i32
    %9 = arith.extui %8 : i1 to i32
    %c0_i32_5 = arith.constant 0 : i32
    %10 = arith.cmpi ne, %9, %c0_i32_5 : i32
    scf.if %10 {
      %cst_39 = arith.constant -3.40282347E+38 : f32
      %75 = vector.broadcast %cst_39 : f32 to vector<1x128xf32>
      %76 = arith.index_cast %arg1 : i32 to index
      %c0_40 = arith.constant 0 : index
      %c0_41 = arith.constant 0 : index
      %77 = vector.load %arg6[%76, %c0_40, %c0_41] : memref<1x1x128xf32, #tpu.memory_space<vmem>>, vector<1x1x128xf32>
      %78 = vector.shape_cast %77 : vector<1x1x128xf32> to vector<1x128xf32>
      %79 = vector.shape_cast %75 : vector<1x128xf32> to vector<1x1x128xf32>
      tpu.vector_store %arg6[%76, %c0_40, %c0_41], %79 {strides = array<i32>} : memref<1x1x128xf32, #tpu.memory_space<vmem>>, vector<1x1x128xf32>,
      %cst_42 = arith.constant 0.000000e+00 : f32
      %80 = vector.broadcast %cst_42 : f32 to vector<1x128xf32>
      %81 = arith.index_cast %arg1 : i32 to index
      %c0_43 = arith.constant 0 : index
      %c0_44 = arith.constant 0 : index
      %82 = vector.load %arg7[%81, %c0_43, %c0_44] : memref<1x1x128xf32, #tpu.memory_space<vmem>>, vector<1x1x128xf32>
      %83 = vector.shape_cast %82 : vector<1x1x128xf32> to vector<1x128xf32>
      %84 = vector.shape_cast %80 : vector<1x128xf32> to vector<1x1x128xf32>
      tpu.vector_store %arg7[%81, %c0_43, %c0_44], %84 {strides = array<i32>} : memref<1x1x128xf32, #tpu.memory_space<vmem>>, vector<1x1x128xf32>,
    } else {
    }
    %c0 = arith.constant 0 : index
    %c0_6 = arith.constant 0 : index
    %11 = vector.load %arg2[%c0, %c0_6] : memref<128x128xf32, #tpu.memory_space<vmem>>, vector<128x128xf32>
    %c128_i32 = arith.constant 128 : i32
    %12 = arith.muli %arg0, %c128_i32 : i32
    %c128_i32_7 = arith.constant 128 : i32
    %13 = arith.muli %arg1, %c128_i32_7 : i32
    %c128_i32_8 = arith.constant 128 : i32
    %14 = arith.addi %13, %c128_i32_8 : i32
    %15 = arith.cmpi slt, %12, %14 : i32
    %c128_i32_9 = arith.constant 128 : i32
    %16 = arith.addi %12, %c128_i32_9 : i32
    %17 = arith.cmpi slt, %13, %16 : i32
    %18 = arith.andi %15, %17 : i1
    %19 = arith.extui %18 : i1 to i32
    %c0_i32_10 = arith.constant 0 : i32
    %20 = arith.cmpi ne, %19, %c0_i32_10 : i32
    scf.if %20 {
      %75 = tpu.iota {dimensions = array<i32: 0>} : vector<128x1xi32>
      %76 = arith.subi %12, %13 : i32
      %77 = vector.broadcast %76 : i32 to vector<128x1xi32>
      %78 = arith.addi %75, %77 : vector<128x1xi32>
      %79 = tpu.iota {dimensions = array<i32: 1>} : vector<1x128xi32>
      %80 = vector.broadcast %78 : vector<128x1xi32> to vector<128x128xi32>
      %81 = vector.broadcast %79 : vector<1x128xi32> to vector<128x128xi32>
      %82 = arith.cmpi eq, %80, %81 : vector<128x128xi32>
      %83 = tpu.iota {dimensions = array<i32: 0>} : vector<128x1xi32>
      %84 = vector.broadcast %12 : i32 to vector<128x1xi32>
      %85 = arith.addi %83, %84 : vector<128x1xi32>
      %c16_i32 = arith.constant 16 : i32
      %86 = vector.broadcast %c16_i32 : i32 to vector<128x1xi32>
      %87 = arith.cmpi slt, %85, %86 : vector<128x1xi32>
      %88 = vector.broadcast %87 : vector<128x1xi1> to vector<128x128xi1>
      %89 = arith.andi %82, %88 : vector<128x128xi1>
      %c0_39 = arith.constant 0 : index
      %c0_40 = arith.constant 0 : index
      %90 = vector.load %arg10[%c0_39, %c0_40] : memref<1x1xf32, #tpu.memory_space<vmem>>, vector<1x1xf32>
      %cst_41 = arith.constant 0.000000e+00 : f32
      %91 = vector.broadcast %cst_41 : f32 to vector<128x128xf32>
      %92 = arith.select %89, %11, %91 : vector<128x128xi1>, vector<128x128xf32>
      %93 = vector.shape_cast %92 : vector<128x128xf32> to vector<1x128x128xf32>
      %cst_42 = arith.constant dense<0.000000e+00> : vector<1xf32>
      %94 = vector.multi_reduction <add>, %93, %cst_42 [1, 2] : vector<1x128x128xf32> to vector<1xf32>
      %95 = vector.shape_cast %94 : vector<1xf32> to vector<1x1x1xf32>
      %96 = vector.extract %95[0, 0, 0] : f32 from vector<1x1x1xf32>
      %97 = vector.broadcast %96 : f32 to vector<1x1xf32>
      %98 = arith.addf %90, %97 : vector<1x1xf32>
      %c0_43 = arith.constant 0 : index
      %c0_44 = arith.constant 0 : index
      %99 = vector.load %arg10[%c0_43, %c0_44] : memref<1x1xf32, #tpu.memory_space<vmem>>, vector<1x1xf32>
      tpu.vector_store %arg10[%c0_43, %c0_44], %98 {strides = array<i32>} : memref<1x1xf32, #tpu.memory_space<vmem>>, vector<1x1xf32>,
    } else {
    }
    %cst = arith.constant dense<0xFF800000> : vector<128xf32>
    %21 = vector.multi_reduction <maximumf>, %11, %cst [1] : vector<128x128xf32> to vector<128xf32>
    %22 = vector.shape_cast %21 : vector<128xf32> to vector<128x1xf32>
    %c0_11 = arith.constant 0 : index
    %c0_12 = arith.constant 0 : index
    %23 = vector.load %arg4[%c0_11, %c0_12] : memref<128x1xf32, #tpu.memory_space<vmem>>, vector<128x1xf32>
    %24 = arith.maximumf %23, %22 : vector<128x1xf32>
    %25 = vector.broadcast %24 : vector<128x1xf32> to vector<128x128xf32>
    %26 = arith.subf %11, %25 : vector<128x128xf32>
    %27 = math.exp %26 : vector<128x128xf32>
    %c0_13 = arith.constant 0 : index
    %c0_14 = arith.constant 0 : index
    %28 = vector.load %arg5[%c0_13, %c0_14] : memref<128x1xf32, #tpu.memory_space<vmem>>, vector<128x1xf32>
    %c0_15 = arith.constant 0 : index
    %c0_16 = arith.constant 0 : index
    %29 = vector.load %arg4[%c0_15, %c0_16] : memref<128x1xf32, #tpu.memory_space<vmem>>, vector<128x1xf32>
    %30 = arith.subf %29, %24 : vector<128x1xf32>
    %31 = math.exp %30 : vector<128x1xf32>
    %32 = arith.mulf %28, %31 : vector<128x1xf32>
    %cst_17 = arith.constant dense<0.000000e+00> : vector<128xf32>
    %33 = vector.multi_reduction <add>, %27, %cst_17 [1] : vector<128x128xf32> to vector<128xf32>
    %34 = vector.shape_cast %33 : vector<128xf32> to vector<128x1xf32>
    %35 = arith.addf %32, %34 : vector<128x1xf32>
    %c0_18 = arith.constant 0 : index
    %c0_19 = arith.constant 0 : index
    %36 = vector.load %arg5[%c0_18, %c0_19] : memref<128x1xf32, #tpu.memory_space<vmem>>, vector<128x1xf32>
    tpu.vector_store %arg5[%c0_18, %c0_19], %35 {strides = array<i32>} : memref<128x1xf32, #tpu.memory_space<vmem>>, vector<128x1xf32>,
    %c0_20 = arith.constant 0 : index
    %c0_21 = arith.constant 0 : index
    %37 = vector.load %arg4[%c0_20, %c0_21] : memref<128x1xf32, #tpu.memory_space<vmem>>, vector<128x1xf32>
    tpu.vector_store %arg4[%c0_20, %c0_21], %24 {strides = array<i32>} : memref<128x1xf32, #tpu.memory_space<vmem>>, vector<128x1xf32>,
    %38 = arith.index_cast %arg1 : i32 to index
    %c0_22 = arith.constant 0 : index
    %c0_23 = arith.constant 0 : index
    %39 = vector.load %arg6[%38, %c0_22, %c0_23] : memref<1x1x128xf32, #tpu.memory_space<vmem>>, vector<1x1x128xf32>
    %40 = vector.shape_cast %39 : vector<1x1x128xf32> to vector<1x128xf32>
    %cst_24 = arith.constant dense<0xFF800000> : vector<128xf32>
    %41 = vector.multi_reduction <maximumf>, %11, %cst_24 [0] : vector<128x128xf32> to vector<128xf32>
    %42 = vector.shape_cast %41 : vector<128xf32> to vector<1x128xf32>
    %43 = arith.maximumf %40, %42 : vector<1x128xf32>
    %44 = vector.broadcast %43 : vector<1x128xf32> to vector<128x128xf32>
    %45 = arith.subf %11, %44 : vector<128x128xf32>
    %46 = math.exp %45 : vector<128x128xf32>
    %47 = arith.index_cast %arg1 : i32 to index
    %c0_25 = arith.constant 0 : index
    %c0_26 = arith.constant 0 : index
    %48 = vector.load %arg7[%47, %c0_25, %c0_26] : memref<1x1x128xf32, #tpu.memory_space<vmem>>, vector<1x1x128xf32>
    %49 = vector.shape_cast %48 : vector<1x1x128xf32> to vector<1x128xf32>
    %50 = arith.subf %40, %43 : vector<1x128xf32>
    %51 = math.exp %50 : vector<1x128xf32>
    %52 = arith.mulf %49, %51 : vector<1x128xf32>
    %cst_27 = arith.constant dense<0.000000e+00> : vector<128xf32>
    %53 = vector.multi_reduction <add>, %46, %cst_27 [0] : vector<128x128xf32> to vector<128xf32>
    %54 = vector.shape_cast %53 : vector<128xf32> to vector<1x128xf32>
    %55 = arith.addf %52, %54 : vector<1x128xf32>
    %56 = arith.index_cast %arg1 : i32 to index
    %c0_28 = arith.constant 0 : index
    %c0_29 = arith.constant 0 : index
    %57 = vector.load %arg6[%56, %c0_28, %c0_29] : memref<1x1x128xf32, #tpu.memory_space<vmem>>, vector<1x1x128xf32>
    %58 = vector.shape_cast %57 : vector<1x1x128xf32> to vector<1x128xf32>
    %59 = vector.shape_cast %43 : vector<1x128xf32> to vector<1x1x128xf32>
    tpu.vector_store %arg6[%56, %c0_28, %c0_29], %59 {strides = array<i32>} : memref<1x1x128xf32, #tpu.memory_space<vmem>>, vector<1x1x128xf32>,
    %60 = arith.index_cast %arg1 : i32 to index
    %c0_30 = arith.constant 0 : index
    %c0_31 = arith.constant 0 : index
    %61 = vector.load %arg7[%60, %c0_30, %c0_31] : memref<1x1x128xf32, #tpu.memory_space<vmem>>, vector<1x1x128xf32>
    %62 = vector.shape_cast %61 : vector<1x1x128xf32> to vector<1x128xf32>
    %63 = vector.shape_cast %55 : vector<1x128xf32> to vector<1x1x128xf32>
    tpu.vector_store %arg7[%60, %c0_30, %c0_31], %63 {strides = array<i32>} : memref<1x1x128xf32, #tpu.memory_space<vmem>>, vector<1x1x128xf32>,
    %c0_i32_32 = arith.constant 0 : i32
    %64 = arith.cmpi eq, %arg1, %c0_i32_32 : i32
    %65 = arith.extui %64 : i1 to i32
    %c0_i32_33 = arith.constant 0 : i32
    %66 = arith.cmpi ne, %65, %c0_i32_33 : i32
    scf.if %66 {
      %c0_39 = arith.constant 0 : index
      %c0_40 = arith.constant 0 : index
      %75 = vector.load %arg4[%c0_39, %c0_40] : memref<128x1xf32, #tpu.memory_space<vmem>>, vector<128x1xf32>
      %c0_41 = arith.constant 0 : index
      %c0_42 = arith.constant 0 : index
      %76 = vector.load %arg5[%c0_41, %c0_42] : memref<128x1xf32, #tpu.memory_space<vmem>>, vector<128x1xf32>
      %77 = math.log %76 : vector<128x1xf32>
      %78 = arith.addf %75, %77 : vector<128x1xf32>
      %79 = tpu.iota {dimensions = array<i32: 0>} : vector<128x1xi32>
      %80 = vector.broadcast %12 : i32 to vector<128x1xi32>
      %81 = arith.addi %79, %80 : vector<128x1xi32>
      %c16_i32 = arith.constant 16 : i32
      %82 = vector.broadcast %c16_i32 : i32 to vector<128x1xi32>
      %83 = arith.cmpi slt, %81, %82 : vector<128x1xi32>
      %cst_43 = arith.constant 0.000000e+00 : f32
      %84 = vector.broadcast %cst_43 : f32 to vector<128x1xf32>
      %85 = arith.select %83, %78, %84 : vector<128x1xi1>, vector<128x1xf32>
      %c0_44 = arith.constant 0 : index
      %c0_45 = arith.constant 0 : index
      %86 = vector.load %arg8[%c0_44, %c0_45] : memref<1x1xf32, #tpu.memory_space<vmem>>, vector<1x1xf32>
      %87 = vector.shape_cast %85 : vector<128x1xf32> to vector<1x128x1xf32>
      %cst_46 = arith.constant dense<0.000000e+00> : vector<1xf32>
      %88 = vector.multi_reduction <add>, %87, %cst_46 [1, 2] : vector<1x128x1xf32> to vector<1xf32>
      %89 = vector.shape_cast %88 : vector<1xf32> to vector<1x1x1xf32>
      %90 = vector.extract %89[0, 0, 0] : f32 from vector<1x1x1xf32>
      %91 = vector.broadcast %90 : f32 to vector<1x1xf32>
      %92 = arith.addf %86, %91 : vector<1x1xf32>
      %c0_47 = arith.constant 0 : index
      %c0_48 = arith.constant 0 : index
      %93 = vector.load %arg8[%c0_47, %c0_48] : memref<1x1xf32, #tpu.memory_space<vmem>>, vector<1x1xf32>
      tpu.vector_store %arg8[%c0_47, %c0_48], %92 {strides = array<i32>} : memref<1x1xf32, #tpu.memory_space<vmem>>, vector<1x1xf32>,
    } else {
    }
    %c0_i32_34 = arith.constant 0 : i32
    %67 = arith.cmpi eq, %arg0, %c0_i32_34 : i32
    %68 = arith.extui %67 : i1 to i32
    %c0_i32_35 = arith.constant 0 : i32
    %69 = arith.cmpi ne, %68, %c0_i32_35 : i32
    scf.if %69 {
      %75 = math.log %55 : vector<1x128xf32>
      %76 = arith.addf %43, %75 : vector<1x128xf32>
      %77 = tpu.iota {dimensions = array<i32: 1>} : vector<1x128xi32>
      %78 = vector.broadcast %13 : i32 to vector<1x128xi32>
      %79 = arith.addi %77, %78 : vector<1x128xi32>
      %c16_i32 = arith.constant 16 : i32
      %80 = vector.broadcast %c16_i32 : i32 to vector<1x128xi32>
      %81 = arith.cmpi slt, %79, %80 : vector<1x128xi32>
      %cst_39 = arith.constant 0.000000e+00 : f32
      %82 = vector.broadcast %cst_39 : f32 to vector<1x128xf32>
      %83 = arith.select %81, %76, %82 : vector<1x128xi1>, vector<1x128xf32>
      %c0_40 = arith.constant 0 : index
      %c0_41 = arith.constant 0 : index
      %84 = vector.load %arg9[%c0_40, %c0_41] : memref<1x1xf32, #tpu.memory_space<vmem>>, vector<1x1xf32>
      %85 = vector.shape_cast %83 : vector<1x128xf32> to vector<1x1x128xf32>
      %cst_42 = arith.constant dense<0.000000e+00> : vector<1xf32>
      %86 = vector.multi_reduction <add>, %85, %cst_42 [1, 2] : vector<1x1x128xf32> to vector<1xf32>
      %87 = vector.shape_cast %86 : vector<1xf32> to vector<1x1x1xf32>
      %88 = vector.extract %87[0, 0, 0] : f32 from vector<1x1x1xf32>
      %89 = vector.broadcast %88 : f32 to vector<1x1xf32>
      %90 = arith.addf %84, %89 : vector<1x1xf32>
      %c0_43 = arith.constant 0 : index
      %c0_44 = arith.constant 0 : index
      %91 = vector.load %arg9[%c0_43, %c0_44] : memref<1x1xf32, #tpu.memory_space<vmem>>, vector<1x1xf32>
      tpu.vector_store %arg9[%c0_43, %c0_44], %90 {strides = array<i32>} : memref<1x1xf32, #tpu.memory_space<vmem>>, vector<1x1xf32>,
    } else {
    }
    %c0_i32_36 = arith.constant 0 : i32
    %70 = arith.cmpi eq, %arg0, %c0_i32_36 : i32
    %c0_i32_37 = arith.constant 0 : i32
    %71 = arith.cmpi eq, %arg1, %c0_i32_37 : i32
    %72 = arith.andi %70, %71 : i1
    %73 = arith.extui %72 : i1 to i32
    %c0_i32_38 = arith.constant 0 : i32
    %74 = arith.cmpi ne, %73, %c0_i32_38 : i32
    scf.if %74 {
      %c0_39 = arith.constant 0 : index
      %c0_40 = arith.constant 0 : index
      %75 = vector.load %arg8[%c0_39, %c0_40] : memref<1x1xf32, #tpu.memory_space<vmem>>, vector<1x1xf32>
      %c0_41 = arith.constant 0 : index
      %c0_42 = arith.constant 0 : index
      %76 = vector.load %arg9[%c0_41, %c0_42] : memref<1x1xf32, #tpu.memory_space<vmem>>, vector<1x1xf32>
      %77 = arith.addf %75, %76 : vector<1x1xf32>
      %cst_43 = arith.constant 5.000000e-01 : f32
      %78 = vector.broadcast %cst_43 : f32 to vector<1x1xf32>
      %79 = arith.mulf %78, %77 : vector<1x1xf32>
      %c0_44 = arith.constant 0 : index
      %c0_45 = arith.constant 0 : index
      %80 = vector.load %arg10[%c0_44, %c0_45] : memref<1x1xf32, #tpu.memory_space<vmem>>, vector<1x1xf32>
      %81 = arith.subf %79, %80 : vector<1x1xf32>
      %cst_46 = arith.constant 6.250000e-02 : f32
      %82 = vector.broadcast %cst_46 : f32 to vector<1x1xf32>
      %83 = arith.mulf %81, %82 : vector<1x1xf32>
      %c0_47 = arith.constant 0 : index
      %c0_48 = arith.constant 0 : index
      %84 = vector.load %arg3[%c0_47, %c0_48] : memref<1x1xf32, #tpu.memory_space<vmem>>, vector<1x1xf32>
      tpu.vector_store %arg3[%c0_47, %c0_48], %83 {strides = array<i32>} : memref<1x1xf32, #tpu.memory_space<vmem>>, vector<1x1xf32>,
    } else {
    }
    return
  }
  func.func @transform_0(%arg0: i32, %arg1: i32) -> (i32, i32) {
    %c0_i32 = arith.constant 0 : i32
    return %arg0, %arg1 : i32, i32
  }
  func.func @transform_1(%arg0: i32, %arg1: i32) -> (i32, i32) {
    %c0_i32 = arith.constant 0 : i32
    %c0_i32_0 = arith.constant 0 : i32
    %c0_i32_1 = arith.constant 0 : i32
    return %c0_i32, %c0_i32_0 : i32, i32
  }
}

</mosaic_0001>

<llo_original>
// kernel: tpu_custom_call.1
$region0: #{tpu_custom_call.1}
  #allocation0 [shape = 'u32[]', space=smem, size = 0x4, offset = 0x4, fixed_abs, tag = 'smem constant byte address 0x4 - core index']
  #allocation1 [shape = 'u32[144,128]{1,0:T(1,128)}', space=vmem, size = 0x12000, scoped, tag = 'internal scratch']
  #allocation2 [shape = 'f32[128,1]{1,0:T(8,128)}', space=vmem, size = 0x10000, scoped, tag = 'scratch operand']
  #allocation3 [shape = 'f32[128,1]{1,0:T(8,128)}', space=vmem, size = 0x10000, scoped, tag = 'scratch operand']
  #allocation4 [shape = 'f32[1,1,128]{2,1,0:T(1,128)}', space=vmem, size = 0x200, scoped, tag = 'scratch operand']
  #allocation5 [shape = 'f32[1,1,128]{2,1,0:T(1,128)}', space=vmem, size = 0x200, scoped, tag = 'scratch operand']
  #allocation6 [shape = 'f32[1,1]{1,0:T(1,128)}', space=vmem, size = 0x200, scoped, tag = 'scratch operand']
  #allocation7 [shape = 'f32[1,1]{1,0:T(1,128)}', space=vmem, size = 0x200, scoped, tag = 'scratch operand']
  #allocation8 [shape = 'f32[1,1]{1,0:T(1,128)}', space=vmem, size = 0x200, scoped, tag = 'scratch operand']
  %s0 = inlined_call_operand.hbm [shape: f32[128,128], index: 0, kind: input, shape index: {}]
  %s1 = inlined_call_operand.hbm [shape: f32[1,1], index: 1, kind: output, shape index: {}]
  %s2 = sld [smem:[#allocation0]]
  $region46: #{tpu_custom_call.1} parent=0
    _
  %s4 = ssub.s32 1, %s2
  %s5 = scalar_select 0, %s4, %s2
  $region1: #{tpu_custom_call.1} parent=0
    #allocation9 [shape = 'u8[65536]{0}', space=vmem, size = 0x10000, scoped, tag = 'input window, operand 0, single buffered']
    #allocation10 [shape = 's32[1]{0}', space=sflag, size = 0x4, scoped, tag = 'scoped memory for tpu_custom_call.1']
    #allocation11 [shape = 's32[1]{0}', space=sflag, size = 0x4, scoped, tag = 'scoped memory for tpu_custom_call.1']
    #allocation12 [shape = 'u8[512]{0}', space=vmem, size = 0x400, scoped, tag = 'output window, operand 0, single buffered']
    %6 = vsyncpa [#allocation10], 0
    %7 = vsyncpa [#allocation11], 0
    // Predicated region
    $region2: #{tpu_custom_call.1} parent=1 // pred_check
      _
    $region3: #{tpu_custom_call.1} parent=1 // pred_check_branch
      %9 = sbr.rel (0) target = $region5
    $region4: #{tpu_custom_call.1} parent=1 // pred_region
      %s11 = ssub.s32 2048, 2048
      %12 = vsyncadd [#allocation10], %s11
      %s13 = sshll.u32 [#allocation9], 4
      %s14 = int_to_ptr.vmem [resolvable:$true] %s13
      %19 = dma.hbm_to_vmem [thread:$0]  %s0, 2048, %s14, [#allocation10], 128, 128, 8
    $region5: #{tpu_custom_call.1} parent=1 // pred_fallthru
      _
    // Predicated region
    $region6: #{tpu_custom_call.1} parent=1 // pred_check
      _
    $region7: #{tpu_custom_call.1} parent=1 // pred_check_branch
      %21 = sbr.rel (0) target = $region9
    $region8: #{tpu_custom_call.1} parent=1 // pred_region
      %22 = dma.done [#allocation10], 2048
    $region9: #{tpu_custom_call.1} parent=1 // pred_fallthru
      _
    %p23 = scmp.eq.s32.totalorder 0, 0
    %p24 = scmp.eq.s32.totalorder 0, 0
    %p25 = pnand %p23, %p24
    %p26 = pneg %p25
    // Predicated region
    $region10: #{tpu_custom_call.1} parent=1 // pred_check
      _
    $region11: #{tpu_custom_call.1} parent=1 // pred_check_branch
      %28 = sbr.rel (%p25) target = $region13
    $region12: #{tpu_custom_call.1} parent=1 // pred_region
      %vm29 = vcmask 0
      %30 = vst.msk [vmem:[#allocation6] sm:$0x1] %vm29, 0.0
      %31 = vst.msk [vmem:[#allocation7] sm:$0x1] %vm29, 0.0
      %32 = vst.msk [vmem:[#allocation8] sm:$0x1] %vm29, 0.0
    $region13: #{tpu_custom_call.1} parent=1 // pred_fallthru
      _
    // Predicated region
    $region14: #{tpu_custom_call.1} parent=1 // pred_check
      %p33 = pneg %p24
    $region15: #{tpu_custom_call.1} parent=1 // pred_check_branch
      %35 = sbr.rel (%p33) target = $region17
    $region16: #{tpu_custom_call.1} parent=1 // pred_region
      %vm36 = vcmask 7168
      %37 = vst.msk [vmem:[#allocation2] sm:$0xff] %vm36, -3.4028235e+38
      %38 = vst.msk [vmem:[#allocation2 + $0x8] sm:$0xff] %vm36, -3.4028235e+38
      %39 = vst.msk [vmem:[#allocation2 + $0x10] sm:$0xff] %vm36, -3.4028235e+38
      %40 = vst.msk [vmem:[#allocation2 + $0x18] sm:$0xff] %vm36, -3.4028235e+38
      %41 = vst.msk [vmem:[#allocation2 + $0x20] sm:$0xff] %vm36, -3.4028235e+38
      %42 = vst.msk [vmem:[#allocation2 + $0x28] sm:$0xff] %vm36, -3.4028235e+38
      %43 = vst.msk [vmem:[#allocation2 + $0x30] sm:$0xff] %vm36, -3.4028235e+38
      %44 = vst.msk [vmem:[#allocation2 + $0x38] sm:$0xff] %vm36, -3.4028235e+38
      %45 = vst.msk [vmem:[#allocation2 + $0x40] sm:$0xff] %vm36, -3.4028235e+38
      %46 = vst.msk [vmem:[#allocation2 + $0x48] sm:$0xff] %vm36, -3.4028235e+38
      %47 = vst.msk [vmem:[#allocation2 + $0x50] sm:$0xff] %vm36, -3.4028235e+38
      %48 = vst.msk [vmem:[#allocation2 + $0x58] sm:$0xff] %vm36, -3.4028235e+38
      %49 = vst.msk [vmem:[#allocation2 + $0x60] sm:$0xff] %vm36, -3.4028235e+38
      %50 = vst.msk [vmem:[#allocation2 + $0x68] sm:$0xff] %vm36, -3.4028235e+38
      %51 = vst.msk [vmem:[#allocation2 + $0x70] sm:$0xff] %vm36, -3.4028235e+38
      %52 = vst.msk [vmem:[#allocation2 + $0x78] sm:$0xff] %vm36, -3.4028235e+38
      %53 = vst.msk [vmem:[#allocation3] sm:$0xff] %vm36, 0.0
      %54 = vst.msk [vmem:[#allocation3 + $0x8] sm:$0xff] %vm36, 0.0
      %55 = vst.msk [vmem:[#allocation3 + $0x10] sm:$0xff] %vm36, 0.0
      %56 = vst.msk [vmem:[#allocation3 + $0x18] sm:$0xff] %vm36, 0.0
      %57 = vst.msk [vmem:[#allocation3 + $0x20] sm:$0xff] %vm36, 0.0
      %58 = vst.msk [vmem:[#allocation3 + $0x28] sm:$0xff] %vm36, 0.0
      %59 = vst.msk [vmem:[#allocation3 + $0x30] sm:$0xff] %vm36, 0.0
      %60 = vst.msk [vmem:[#allocation3 + $0x38] sm:$0xff] %vm36, 0.0
      %61 = vst.msk [vmem:[#allocation3 + $0x40] sm:$0xff] %vm36, 0.0
      %62 = vst.msk [vmem:[#allocation3 + $0x48] sm:$0xff] %vm36, 0.0
      %63 = vst.msk [vmem:[#allocation3 + $0x50] sm:$0xff] %vm36, 0.0
      %64 = vst.msk [vmem:[#allocation3 + $0x58] sm:$0xff] %vm36, 0.0
      %65 = vst.msk [vmem:[#allocation3 + $0x60] sm:$0xff] %vm36, 0.0
      %66 = vst.msk [vmem:[#allocation3 + $0x68] sm:$0xff] %vm36, 0.0
      %67 = vst.msk [vmem:[#allocation3 + $0x70] sm:$0xff] %vm36, 0.0
      %68 = vst.msk [vmem:[#allocation3 + $0x78] sm:$0xff] %vm36, 0.0
    $region17: #{tpu_custom_call.1} parent=1 // pred_fallthru
      _
    // Predicated region
    $region18: #{tpu_custom_call.1} parent=1 // pred_check
      %p69 = pneg %p23
    $region19: #{tpu_custom_call.1} parent=1 // pred_check_branch
      %71 = sbr.rel (%p69) target = $region21
    $region20: #{tpu_custom_call.1} parent=1 // pred_region
      %72 = vst [vmem:[#allocation4] sm:$0x1] -3.4028235e+38
      %73 = vst [vmem:[#allocation5] sm:$0x1] 0.0
    $region21: #{tpu_custom_call.1} parent=1 // pred_fallthru
      _
    %v74 = vld [vmem:[#allocation9] sm:$0xff]
    %v75 = vld [vmem:[#allocation9 + $0x8] sm:$0xff]
    %v76 = vld [vmem:[#allocation9 + $0x10] sm:$0xff]
    %v77 = vld [vmem:[#allocation9 + $0x18] sm:$0xff]
    %v78 = vld [vmem:[#allocation9 + $0x20] sm:$0xff]
    %v79 = vld [vmem:[#allocation9 + $0x28] sm:$0xff]
    %v80 = vld [vmem:[#allocation9 + $0x30] sm:$0xff]
    %v81 = vld [vmem:[#allocation9 + $0x38] sm:$0xff]
    %v82 = vld [vmem:[#allocation9 + $0x40] sm:$0xff]
    %v83 = vld [vmem:[#allocation9 + $0x48] sm:$0xff]
    %v84 = vld [vmem:[#allocation9 + $0x50] sm:$0xff]
    %v85 = vld [vmem:[#allocation9 + $0x58] sm:$0xff]
    %v86 = vld [vmem:[#allocation9 + $0x60] sm:$0xff]
    %v87 = vld [vmem:[#allocation9 + $0x68] sm:$0xff]
    %v88 = vld [vmem:[#allocation9 + $0x70] sm:$0xff]
    %v89 = vld [vmem:[#allocation9 + $0x78] sm:$0xff]
    %s90 = smul.u32 0, 128
    %s91 = smul.u32 0, 128
    %s92 = sadd.s32 %s91, 128
    %p93 = scmp.lt.s32.totalorder %s90, %s92
    %s94 = sadd.s32 %s90, 128
    %p95 = scmp.lt.s32.totalorder %s91, %s94
    %p96 = pnand %p93, %p95
    %p97 = pneg %p96
    // Predicated region
    $region22: #{tpu_custom_call.1} parent=1 // pred_check
      _
    $region23: #{tpu_custom_call.1} parent=1 // pred_check_branch
      %99 = sbr.rel (%p96) target = $region25
    $region24: #{tpu_custom_call.1} parent=1 // pred_region
      %v100 = vlaneseq
      %v101 = vshrl.u32 %v100, 7
      %v102 = vadd.s32 %v101, 8
      %v103 = vadd.s32 %v101, 16
      %v104 = vadd.s32 %v101, 24
      %v105 = vadd.s32 %v101, 32
      %v106 = vadd.s32 %v101, 40
      %v107 = vadd.s32 %v101, 48
      %v108 = vadd.s32 %v101, 56
      %v109 = vadd.s32 %v101, 64
      %v110 = vadd.s32 %v101, 72
      %v111 = vadd.s32 %v101, 80
      %v112 = vadd.s32 %v101, 88
      %v113 = vadd.s32 %v101, 96
      %v114 = vadd.s32 %v101, 104
      %v115 = vadd.s32 %v101, 112
      %v116 = vadd.s32 %v101, 120
      %s117 = ssub.s32 %s90, %s91
      %v118 = vstv %s117
      %v119 = vadd.s32 %v101, %v118
      %v120 = vadd.s32 %v102, %v118
      %v121 = vadd.s32 %v103, %v118
      %v122 = vadd.s32 %v104, %v118
      %v123 = vadd.s32 %v105, %v118
      %v124 = vadd.s32 %v106, %v118
      %v125 = vadd.s32 %v107, %v118
      %v126 = vadd.s32 %v108, %v118
      %v127 = vadd.s32 %v109, %v118
      %v128 = vadd.s32 %v110, %v118
      %v129 = vadd.s32 %v111, %v118
      %v130 = vadd.s32 %v112, %v118
      %v131 = vadd.s32 %v113, %v118
      %v132 = vadd.s32 %v114, %v118
      %v133 = vadd.s32 %v115, %v118
      %v134 = vadd.s32 %v116, %v118
      %v135 = vlaneseq
      %v136 = vand.u32 %v135, 127
      %vm137 = vcmp.eq.s32.totalorder %v119, %v136
      %vm138 = vcmp.eq.s32.totalorder %v120, %v136
      %vm139 = vcmp.eq.s32.totalorder %v121, %v136
      %vm140 = vcmp.eq.s32.totalorder %v122, %v136
      %vm141 = vcmp.eq.s32.totalorder %v123, %v136
      %vm142 = vcmp.eq.s32.totalorder %v124, %v136
      %vm143 = vcmp.eq.s32.totalorder %v125, %v136
      %vm144 = vcmp.eq.s32.totalorder %v126, %v136
      %vm145 = vcmp.eq.s32.totalorder %v127, %v136
      %vm146 = vcmp.eq.s32.totalorder %v128, %v136
      %vm147 = vcmp.eq.s32.totalorder %v129, %v136
      %vm148 = vcmp.eq.s32.totalorder %v130, %v136
      %vm149 = vcmp.eq.s32.totalorder %v131, %v136
      %vm150 = vcmp.eq.s32.totalorder %v132, %v136
      %vm151 = vcmp.eq.s32.totalorder %v133, %v136
      %vm152 = vcmp.eq.s32.totalorder %v134, %v136
      %v153 = vstv %s90
      %v154 = vadd.s32 %v101, %v153
      %v155 = vadd.s32 %v102, %v153
      %v156 = vadd.s32 %v103, %v153
      %v157 = vadd.s32 %v104, %v153
      %v158 = vadd.s32 %v105, %v153
      %v159 = vadd.s32 %v106, %v153
      %v160 = vadd.s32 %v107, %v153
      %v161 = vadd.s32 %v108, %v153
      %v162 = vadd.s32 %v109, %v153
      %v163 = vadd.s32 %v110, %v153
      %v164 = vadd.s32 %v111, %v153
      %v165 = vadd.s32 %v112, %v153
      %v166 = vadd.s32 %v113, %v153
      %v167 = vadd.s32 %v114, %v153
      %v168 = vadd.s32 %v115, %v153
      %v169 = vadd.s32 %v116, %v153
      %vm170 = vcmp.lt.s32.totalorder %v154, 16
      %vm171 = vcmp.lt.s32.totalorder %v155, 16
      %vm172 = vcmp.lt.s32.totalorder %v156, 16
      %vm173 = vcmp.lt.s32.totalorder %v157, 16
      %vm174 = vcmp.lt.s32.totalorder %v158, 16
      %vm175 = vcmp.lt.s32.totalorder %v159, 16
      %vm176 = vcmp.lt.s32.totalorder %v160, 16
      %vm177 = vcmp.lt.s32.totalorder %v161, 16
      %vm178 = vcmp.lt.s32.totalorder %v162, 16
      %vm179 = vcmp.lt.s32.totalorder %v163, 16
      %vm180 = vcmp.lt.s32.totalorder %v164, 16
      %vm181 = vcmp.lt.s32.totalorder %v165, 16
      %vm182 = vcmp.lt.s32.totalorder %v166, 16
      %vm183 = vcmp.lt.s32.totalorder %v167, 16
      %vm184 = vcmp.lt.s32.totalorder %v168, 16
      %vm185 = vcmp.lt.s32.totalorder %v169, 16
      %v186 = vsel %vm170, 1, 0
      %v187 = vsel %vm171, 1, 0
      %v188 = vsel %vm172, 1, 0
      %v189 = vsel %vm173, 1, 0
      %v190 = vsel %vm174, 1, 0
      %v191 = vsel %vm175, 1, 0
      %v192 = vsel %vm176, 1, 0
      %v193 = vsel %vm177, 1, 0
      %v194 = vsel %vm178, 1, 0
      %v195 = vsel %vm179, 1, 0
      %v196 = vsel %vm180, 1, 0
      %v197 = vsel %vm181, 1, 0
      %v198 = vsel %vm182, 1, 0
      %v199 = vsel %vm183, 1, 0
      %v200 = vsel %vm184, 1, 0
      %v201 = vsel %vm185, 1, 0
      %vm202 = vcmp.eq.s32.totalorder %v186, 1
      %vm203 = vcmp.eq.s32.totalorder %v187, 1
      %vm204 = vcmp.eq.s32.totalorder %v188, 1
      %vm205 = vcmp.eq.s32.totalorder %v189, 1
      %vm206 = vcmp.eq.s32.totalorder %v190, 1
      %vm207 = vcmp.eq.s32.totalorder %v191, 1
      %vm208 = vcmp.eq.s32.totalorder %v192, 1
      %vm209 = vcmp.eq.s32.totalorder %v193, 1
      %vm210 = vcmp.eq.s32.totalorder %v194, 1
      %vm211 = vcmp.eq.s32.totalorder %v195, 1
      %vm212 = vcmp.eq.s32.totalorder %v196, 1
      %vm213 = vcmp.eq.s32.totalorder %v197, 1
      %vm214 = vcmp.eq.s32.totalorder %v198, 1
      %vm215 = vcmp.eq.s32.totalorder %v199, 1
      %vm216 = vcmp.eq.s32.totalorder %v200, 1
      %vm217 = vcmp.eq.s32.totalorder %v201, 1
      %vm218 = vmand %vm137, %vm202
      %vm219 = vmand %vm138, %vm203
      %vm220 = vmand %vm139, %vm204
      %vm221 = vmand %vm140, %vm205
      %vm222 = vmand %vm141, %vm206
      %vm223 = vmand %vm142, %vm207
      %vm224 = vmand %vm143, %vm208
      %vm225 = vmand %vm144, %vm209
      %vm226 = vmand %vm145, %vm210
      %vm227 = vmand %vm146, %vm211
      %vm228 = vmand %vm147, %vm212
      %vm229 = vmand %vm148, %vm213
      %vm230 = vmand %vm149, %vm214
      %vm231 = vmand %vm150, %vm215
      %vm232 = vmand %vm151, %vm216
      %vm233 = vmand %vm152, %vm217
      %v234 = vld [vmem:[#allocation8] sm:$0x1]
      %v235 = vsel %vm218, %v74, 0.0
      %v236 = vsel %vm219, %v75, 0.0
      %v237 = vsel %vm220, %v76, 0.0
      %v238 = vsel %vm221, %v77, 0.0
      %v239 = vsel %vm222, %v78, 0.0
      %v240 = vsel %vm223, %v79, 0.0
      %v241 = vsel %vm224, %v80, 0.0
      %v242 = vsel %vm225, %v81, 0.0
      %v243 = vsel %vm226, %v82, 0.0
      %v244 = vsel %vm227, %v83, 0.0
      %v245 = vsel %vm228, %v84, 0.0
      %v246 = vsel %vm229, %v85, 0.0
      %v247 = vsel %vm230, %v86, 0.0
      %v248 = vsel %vm231, %v87, 0.0
      %v249 = vsel %vm232, %v88, 0.0
      %v250 = vsel %vm233, %v89, 0.0
      %v251 = vadd.f32 %v235, %v236
      %v252 = vadd.f32 %v251, %v237
      %v253 = vadd.f32 %v252, %v238
      %v254 = vadd.f32 %v253, %v239
      %v255 = vadd.f32 %v254, %v240
      %v256 = vadd.f32 %v255, %v241
      %v257 = vadd.f32 %v256, %v242
      %v258 = vadd.f32 %v257, %v243
      %v259 = vadd.f32 %v258, %v244
      %v260 = vadd.f32 %v259, %v245
      %v261 = vadd.f32 %v260, %v246
      %v262 = vadd.f32 %v261, %v247
      %v263 = vadd.f32 %v262, %v248
      %v264 = vadd.f32 %v263, %v249
      %v265 = vadd.f32 %v264, %v250
      %266 = vadd.xlane.f32.xlu0 %v265
      %v267 = vpop.xlane.xlu0 %266
      %v268 = vrot.slane %v267, 4
      %v269 = vadd.f32 %v267, %v268
      %v270 = vrot.slane %v269, 2
      %v271 = vadd.f32 %v269, %v270
      %v272 = vrot.slane %v271, 1
      %v273 = vadd.f32 %v271, %v272
      %s274 = vtos %v273
      %v275 = vstv %s274
      %v276 = vadd.f32 %v234, %v275
      %vm277 = vcmask 0
      %278 = vst.msk [vmem:[#allocation8] sm:$0x1] %vm277, %v276
    $region25: #{tpu_custom_call.1} parent=1 // pred_fallthru
      _
    %279 = vmax.xlane.f32.xlu0 %v74
    %v280 = vpop.xlane.xlu0 %279
    %281 = vmax.xlane.f32.xlu0 %v75
    %v282 = vpop.xlane.xlu0 %281
    %283 = vmax.xlane.f32.xlu0 %v76
    %v284 = vpop.xlane.xlu0 %283
    %285 = vmax.xlane.f32.xlu0 %v77
    %v286 = vpop.xlane.xlu0 %285
    %287 = vmax.xlane.f32.xlu0 %v78
    %v288 = vpop.xlane.xlu0 %287
    %289 = vmax.xlane.f32.xlu0 %v79
    %v290 = vpop.xlane.xlu0 %289
    %291 = vmax.xlane.f32.xlu0 %v80
    %v292 = vpop.xlane.xlu0 %291
    %293 = vmax.xlane.f32.xlu0 %v81
    %v294 = vpop.xlane.xlu0 %293
    %295 = vmax.xlane.f32.xlu0 %v82
    %v296 = vpop.xlane.xlu0 %295
    %297 = vmax.xlane.f32.xlu0 %v83
    %v298 = vpop.xlane.xlu0 %297
    %299 = vmax.xlane.f32.xlu0 %v84
    %v300 = vpop.xlane.xlu0 %299
    %301 = vmax.xlane.f32.xlu0 %v85
    %v302 = vpop.xlane.xlu0 %301
    %303 = vmax.xlane.f32.xlu0 %v86
    %v304 = vpop.xlane.xlu0 %303
    %305 = vmax.xlane.f32.xlu0 %v87
    %v306 = vpop.xlane.xlu0 %305
    %307 = vmax.xlane.f32.xlu0 %v88
    %v308 = vpop.xlane.xlu0 %307
    %309 = vmax.xlane.f32.xlu0 %v89
    %v310 = vpop.xlane.xlu0 %309
    %v311 = vld [vmem:[#allocation2] sm:$0xff]
    %v312 = vld [vmem:[#allocation2 + $0x8] sm:$0xff]
    %v313 = vld [vmem:[#allocation2 + $0x10] sm:$0xff]
    %v314 = vld [vmem:[#allocation2 + $0x18] sm:$0xff]
    %v315 = vld [vmem:[#allocation2 + $0x20] sm:$0xff]
    %v316 = vld [vmem:[#allocation2 + $0x28] sm:$0xff]
    %v317 = vld [vmem:[#allocation2 + $0x30] sm:$0xff]
    %v318 = vld [vmem:[#allocation2 + $0x38] sm:$0xff]
    %v319 = vld [vmem:[#allocation2 + $0x40] sm:$0xff]
    %v320 = vld [vmem:[#allocation2 + $0x48] sm:$0xff]
    %v321 = vld [vmem:[#allocation2 + $0x50] sm:$0xff]
    %v322 = vld [vmem:[#allocation2 + $0x58] sm:$0xff]
    %v323 = vld [vmem:[#allocation2 + $0x60] sm:$0xff]
    %v324 = vld [vmem:[#allocation2 + $0x68] sm:$0xff]
    %v325 = vld [vmem:[#allocation2 + $0x70] sm:$0xff]
    %v326 = vld [vmem:[#allocation2 + $0x78] sm:$0xff]
    %v327 = vmax.f32 %v311, %v280
    %v328 = vmax.f32 %v312, %v282
    %v329 = vmax.f32 %v313, %v284
    %v330 = vmax.f32 %v314, %v286
    %v331 = vmax.f32 %v315, %v288
    %v332 = vmax.f32 %v316, %v290
    %v333 = vmax.f32 %v317, %v292
    %v334 = vmax.f32 %v318, %v294
    %v335 = vmax.f32 %v319, %v296
    %v336 = vmax.f32 %v320, %v298
    %v337 = vmax.f32 %v321, %v300
    %v338 = vmax.f32 %v322, %v302
    %v339 = vmax.f32 %v323, %v304
    %v340 = vmax.f32 %v324, %v306
    %v341 = vmax.f32 %v325, %v308
    %v342 = vmax.f32 %v326, %v310
    %344 = vset.pattern.permute.xlu0 0
    %345 = vperm.xlu0 %344, %v327
    %v346 = vpop.permute.xlu0 %345
    %349 = vset.pattern.permute.xlu0 0
    %350 = vperm.xlu0 %349, %v328
    %v351 = vpop.permute.xlu0 %350
    %354 = vset.pattern.permute.xlu0 0
    %355 = vperm.xlu0 %354, %v329
    %v356 = vpop.permute.xlu0 %355
    %359 = vset.pattern.permute.xlu0 0
    %360 = vperm.xlu0 %359, %v330
    %v361 = vpop.permute.xlu0 %360
    %364 = vset.pattern.permute.xlu0 0
    %365 = vperm.xlu0 %364, %v331
    %v366 = vpop.permute.xlu0 %365
    %369 = vset.pattern.permute.xlu0 0
    %370 = vperm.xlu0 %369, %v332
    %v371 = vpop.permute.xlu0 %370
    %374 = vset.pattern.permute.xlu0 0
    %375 = vperm.xlu0 %374, %v333
    %v376 = vpop.permute.xlu0 %375
    %379 = vset.pattern.permute.xlu0 0
    %380 = vperm.xlu0 %379, %v334
    %v381 = vpop.permute.xlu0 %380
    %384 = vset.pattern.permute.xlu0 0
    %385 = vperm.xlu0 %384, %v335
    %v386 = vpop.permute.xlu0 %385
    %389 = vset.pattern.permute.xlu0 0
    %390 = vperm.xlu0 %389, %v336
    %v391 = vpop.permute.xlu0 %390
    %394 = vset.pattern.permute.xlu0 0
    %395 = vperm.xlu0 %394, %v337
    %v396 = vpop.permute.xlu0 %395
    %399 = vset.pattern.permute.xlu0 0
    %400 = vperm.xlu0 %399, %v338
    %v401 = vpop.permute.xlu0 %400
    %404 = vset.pattern.permute.xlu0 0
    %405 = vperm.xlu0 %404, %v339
    %v406 = vpop.permute.xlu0 %405
    %409 = vset.pattern.permute.xlu0 0
    %410 = vperm.xlu0 %409, %v340
    %v411 = vpop.permute.xlu0 %410
    %414 = vset.pattern.permute.xlu0 0
    %415 = vperm.xlu0 %414, %v341
    %v416 = vpop.permute.xlu0 %415
    %419 = vset.pattern.permute.xlu0 0
    %420 = vperm.xlu0 %419, %v342
    %v421 = vpop.permute.xlu0 %420
    %v423 = vsub.f32 %v74, %v346
    %v424 = vsub.f32 %v75, %v351
    %v425 = vsub.f32 %v76, %v356
    %v426 = vsub.f32 %v77, %v361
    %v427 = vsub.f32 %v78, %v366
    %v428 = vsub.f32 %v79, %v371
    %v429 = vsub.f32 %v80, %v376
    %v430 = vsub.f32 %v81, %v381
    %v431 = vsub.f32 %v82, %v386
    %v432 = vsub.f32 %v83, %v391
    %v433 = vsub.f32 %v84, %v396
    %v434 = vsub.f32 %v85, %v401
    %v435 = vsub.f32 %v86, %v406
    %v436 = vsub.f32 %v87, %v411
    %v437 = vsub.f32 %v88, %v416
    %v438 = vsub.f32 %v89, %v421
    %v439 = vmul.f32 %v423, 1.442695
    %v440 = vpow.pop %v439
    %v441 = vmul.f32 %v424, 1.442695
    %v442 = vpow.pop %v441
    %v443 = vmul.f32 %v425, 1.442695
    %v444 = vpow.pop %v443
    %v445 = vmul.f32 %v426, 1.442695
    %v446 = vpow.pop %v445
    %v447 = vmul.f32 %v427, 1.442695
    %v448 = vpow.pop %v447
    %v449 = vmul.f32 %v428, 1.442695
    %v450 = vpow.pop %v449
    %v451 = vmul.f32 %v429, 1.442695
    %v452 = vpow.pop %v451
    %v453 = vmul.f32 %v430, 1.442695
    %v454 = vpow.pop %v453
    %v455 = vmul.f32 %v431, 1.442695
    %v456 = vpow.pop %v455
    %v457 = vmul.f32 %v432, 1.442695
    %v458 = vpow.pop %v457
    %v459 = vmul.f32 %v433, 1.442695
    %v460 = vpow.pop %v459
    %v461 = vmul.f32 %v434, 1.442695
    %v462 = vpow.pop %v461
    %v463 = vmul.f32 %v435, 1.442695
    %v464 = vpow.pop %v463
    %v465 = vmul.f32 %v436, 1.442695
    %v466 = vpow.pop %v465
    %v467 = vmul.f32 %v437, 1.442695
    %v468 = vpow.pop %v467
    %v469 = vmul.f32 %v438, 1.442695
    %v470 = vpow.pop %v469
    %v471 = vld [vmem:[#allocation3] sm:$0xff]
    %v472 = vld [vmem:[#allocation3 + $0x8] sm:$0xff]
    %v473 = vld [vmem:[#allocation3 + $0x10] sm:$0xff]
    %v474 = vld [vmem:[#allocation3 + $0x18] sm:$0xff]
    %v475 = vld [vmem:[#allocation3 + $0x20] sm:$0xff]
    %v476 = vld [vmem:[#allocation3 + $0x28] sm:$0xff]
    %v477 = vld [vmem:[#allocation3 + $0x30] sm:$0xff]
    %v478 = vld [vmem:[#allocation3 + $0x38] sm:$0xff]
    %v479 = vld [vmem:[#allocation3 + $0x40] sm:$0xff]
    %v480 = vld [vmem:[#allocation3 + $0x48] sm:$0xff]
    %v481 = vld [vmem:[#allocation3 + $0x50] sm:$0xff]
    %v482 = vld [vmem:[#allocation3 + $0x58] sm:$0xff]
    %v483 = vld [vmem:[#allocation3 + $0x60] sm:$0xff]
    %v484 = vld [vmem:[#allocation3 + $0x68] sm:$0xff]
    %v485 = vld [vmem:[#allocation3 + $0x70] sm:$0xff]
    %v486 = vld [vmem:[#allocation3 + $0x78] sm:$0xff]
    %v487 = vsub.f32 %v311, %v327
    %v488 = vsub.f32 %v312, %v328
    %v489 = vsub.f32 %v313, %v329
    %v490 = vsub.f32 %v314, %v330
    %v491 = vsub.f32 %v315, %v331
    %v492 = vsub.f32 %v316, %v332
    %v493 = vsub.f32 %v317, %v333
    %v494 = vsub.f32 %v318, %v334
    %v495 = vsub.f32 %v319, %v335
    %v496 = vsub.f32 %v320, %v336
    %v497 = vsub.f32 %v321, %v337
    %v498 = vsub.f32 %v322, %v338
    %v499 = vsub.f32 %v323, %v339
    %v500 = vsub.f32 %v324, %v340
    %v501 = vsub.f32 %v325, %v341
    %v502 = vsub.f32 %v326, %v342
    %v503 = vmul.f32 %v487, 1.442695
    %v504 = vpow.pop %v503
    %v505 = vmul.f32 %v488, 1.442695
    %v506 = vpow.pop %v505
    %v507 = vmul.f32 %v489, 1.442695
    %v508 = vpow.pop %v507
    %v509 = vmul.f32 %v490, 1.442695
    %v510 = vpow.pop %v509
    %v511 = vmul.f32 %v491, 1.442695
    %v512 = vpow.pop %v511
    %v513 = vmul.f32 %v492, 1.442695
    %v514 = vpow.pop %v513
    %v515 = vmul.f32 %v493, 1.442695
    %v516 = vpow.pop %v515
    %v517 = vmul.f32 %v494, 1.442695
    %v518 = vpow.pop %v517
    %v519 = vmul.f32 %v495, 1.442695
    %v520 = vpow.pop %v519
    %v521 = vmul.f32 %v496, 1.442695
    %v522 = vpow.pop %v521
    %v523 = vmul.f32 %v497, 1.442695
    %v524 = vpow.pop %v523
    %v525 = vmul.f32 %v498, 1.442695
    %v526 = vpow.pop %v525
    %v527 = vmul.f32 %v499, 1.442695
    %v528 = vpow.pop %v527
    %v529 = vmul.f32 %v500, 1.442695
    %v530 = vpow.pop %v529
    %v531 = vmul.f32 %v501, 1.442695
    %v532 = vpow.pop %v531
    %v533 = vmul.f32 %v502, 1.442695
    %v534 = vpow.pop %v533
    %v535 = vmul.f32 %v471, %v504
    %v536 = vmul.f32 %v472, %v506
    %v537 = vmul.f32 %v473, %v508
    %v538 = vmul.f32 %v474, %v510
    %v539 = vmul.f32 %v475, %v512
    %v540 = vmul.f32 %v476, %v514
    %v541 = vmul.f32 %v477, %v516
    %v542 = vmul.f32 %v478, %v518
    %v543 = vmul.f32 %v479, %v520
    %v544 = vmul.f32 %v480, %v522
    %v545 = vmul.f32 %v481, %v524
    %v546 = vmul.f32 %v482, %v526
    %v547 = vmul.f32 %v483, %v528
    %v548 = vmul.f32 %v484, %v530
    %v549 = vmul.f32 %v485, %v532
    %v550 = vmul.f32 %v486, %v534
    %551 = vadd.xlane.f32.xlu0 %v440
    %v552 = vpop.xlane.xlu0 %551
    %553 = vadd.xlane.f32.xlu0 %v442
    %v554 = vpop.xlane.xlu0 %553
    %555 = vadd.xlane.f32.xlu0 %v444
    %v556 = vpop.xlane.xlu0 %555
    %557 = vadd.xlane.f32.xlu0 %v446
    %v558 = vpop.xlane.xlu0 %557
    %559 = vadd.xlane.f32.xlu0 %v448
    %v560 = vpop.xlane.xlu0 %559
    %561 = vadd.xlane.f32.xlu0 %v450
    %v562 = vpop.xlane.xlu0 %561
    %563 = vadd.xlane.f32.xlu0 %v452
    %v564 = vpop.xlane.xlu0 %563
    %565 = vadd.xlane.f32.xlu0 %v454
    %v566 = vpop.xlane.xlu0 %565
    %567 = vadd.xlane.f32.xlu0 %v456
    %v568 = vpop.xlane.xlu0 %567
    %569 = vadd.xlane.f32.xlu0 %v458
    %v570 = vpop.xlane.xlu0 %569
    %571 = vadd.xlane.f32.xlu0 %v460
    %v572 = vpop.xlane.xlu0 %571
    %573 = vadd.xlane.f32.xlu0 %v462
    %v574 = vpop.xlane.xlu0 %573
    %575 = vadd.xlane.f32.xlu0 %v464
    %v576 = vpop.xlane.xlu0 %575
    %577 = vadd.xlane.f32.xlu0 %v466
    %v578 = vpop.xlane.xlu0 %577
    %579 = vadd.xlane.f32.xlu0 %v468
    %v580 = vpop.xlane.xlu0 %579
    %581 = vadd.xlane.f32.xlu0 %v470
    %v582 = vpop.xlane.xlu0 %581
    %v583 = vadd.f32 %v535, %v552
    %v584 = vadd.f32 %v536, %v554
    %v585 = vadd.f32 %v537, %v556
    %v586 = vadd.f32 %v538, %v558
    %v587 = vadd.f32 %v539, %v560
    %v588 = vadd.f32 %v540, %v562
    %v589 = vadd.f32 %v541, %v564
    %v590 = vadd.f32 %v542, %v566
    %v591 = vadd.f32 %v543, %v568
    %v592 = vadd.f32 %v544, %v570
    %v593 = vadd.f32 %v545, %v572
    %v594 = vadd.f32 %v546, %v574
    %v595 = vadd.f32 %v547, %v576
    %v596 = vadd.f32 %v548, %v578
    %v597 = vadd.f32 %v549, %v580
    %v598 = vadd.f32 %v550, %v582
    %vm599 = vcmask 7168
    %600 = vst.msk [vmem:[#allocation3] sm:$0xff] %vm599, %v583
    %601 = vst.msk [vmem:[#allocation3 + $0x8] sm:$0xff] %vm599, %v584
    %602 = vst.msk [vmem:[#allocation3 + $0x10] sm:$0xff] %vm599, %v585
    %603 = vst.msk [vmem:[#allocation3 + $0x18] sm:$0xff] %vm599, %v586
    %604 = vst.msk [vmem:[#allocation3 + $0x20] sm:$0xff] %vm599, %v587
    %605 = vst.msk [vmem:[#allocation3 + $0x28] sm:$0xff] %vm599, %v588
    %606 = vst.msk [vmem:[#allocation3 + $0x30] sm:$0xff] %vm599, %v589
    %607 = vst.msk [vmem:[#allocation3 + $0x38] sm:$0xff] %vm599, %v590
    %608 = vst.msk [vmem:[#allocation3 + $0x40] sm:$0xff] %vm599, %v591
    %609 = vst.msk [vmem:[#allocation3 + $0x48] sm:$0xff] %vm599, %v592
    %610 = vst.msk [vmem:[#allocation3 + $0x50] sm:$0xff] %vm599, %v593
    %611 = vst.msk [vmem:[#allocation3 + $0x58] sm:$0xff] %vm599, %v594
    %612 = vst.msk [vmem:[#allocation3 + $0x60] sm:$0xff] %vm599, %v595
    %613 = vst.msk [vmem:[#allocation3 + $0x68] sm:$0xff] %vm599, %v596
    %614 = vst.msk [vmem:[#allocation3 + $0x70] sm:$0xff] %vm599, %v597
    %615 = vst.msk [vmem:[#allocation3 + $0x78] sm:$0xff] %vm599, %v598
    %616 = vst.msk [vmem:[#allocation2] sm:$0xff] %vm599, %v327
    %617 = vst.msk [vmem:[#allocation2 + $0x8] sm:$0xff] %vm599, %v328
    %618 = vst.msk [vmem:[#allocation2 + $0x10] sm:$0xff] %vm599, %v329
    %619 = vst.msk [vmem:[#allocation2 + $0x18] sm:$0xff] %vm599, %v330
    %620 = vst.msk [vmem:[#allocation2 + $0x20] sm:$0xff] %vm599, %v331
    %621 = vst.msk [vmem:[#allocation2 + $0x28] sm:$0xff] %vm599, %v332
    %622 = vst.msk [vmem:[#allocation2 + $0x30] sm:$0xff] %vm599, %v333
    %623 = vst.msk [vmem:[#allocation2 + $0x38] sm:$0xff] %vm599, %v334
    %624 = vst.msk [vmem:[#allocation2 + $0x40] sm:$0xff] %vm599, %v335
    %625 = vst.msk [vmem:[#allocation2 + $0x48] sm:$0xff] %vm599, %v336
    %626 = vst.msk [vmem:[#allocation2 + $0x50] sm:$0xff] %vm599, %v337
    %627 = vst.msk [vmem:[#allocation2 + $0x58] sm:$0xff] %vm599, %v338
    %628 = vst.msk [vmem:[#allocation2 + $0x60] sm:$0xff] %vm599, %v339
    %629 = vst.msk [vmem:[#allocation2 + $0x68] sm:$0xff] %vm599, %v340
    %630 = vst.msk [vmem:[#allocation2 + $0x70] sm:$0xff] %vm599, %v341
    %631 = vst.msk [vmem:[#allocation2 + $0x78] sm:$0xff] %vm599, %v342
    %v632 = vld [vmem:[#allocation4] sm:$0x1]
    %v633 = vmax.f32 %v74, %v78
    %v634 = vmax.f32 %v75, %v79
    %v635 = vmax.f32 %v76, %v80
    %v636 = vmax.f32 %v77, %v81
    %v637 = vmax.f32 %v633, %v82
    %v638 = vmax.f32 %v634, %v83
    %v639 = vmax.f32 %v635, %v84
    %v640 = vmax.f32 %v636, %v85
    %v641 = vmax.f32 %v637, %v86
    %v642 = vmax.f32 %v638, %v87
    %v643 = vmax.f32 %v639, %v88
    %v644 = vmax.f32 %v640, %v89
    %v645 = vmax.f32 %v641, %v642
    %v646 = vmax.f32 %v643, %v644
    %v647 = vmax.f32 %v645, %v646
    %v648 = vrot.slane %v647, 4
    %v649 = vmax.f32 %v647, %v648
    %v650 = vrot.slane %v649, 2
    %v651 = vmax.f32 %v649, %v650
    %v652 = vrot.slane %v651, 1
    %v653 = vmax.f32 %v651, %v652
    %v654 = vmax.f32 %v632, %v653
    %v656 = vlaneseq
    %v657 = vshrl.u32 %v656, 7
    %v658 = vsub.s32 0, %v657
    %v659 = vrot.slane %v654, %v658
    %v661 = vsub.f32 %v74, %v659
    %v662 = vsub.f32 %v75, %v659
    %v663 = vsub.f32 %v76, %v659
    %v664 = vsub.f32 %v77, %v659
    %v665 = vsub.f32 %v78, %v659
    %v666 = vsub.f32 %v79, %v659
    %v667 = vsub.f32 %v80, %v659
    %v668 = vsub.f32 %v81, %v659
    %v669 = vsub.f32 %v82, %v659
    %v670 = vsub.f32 %v83, %v659
    %v671 = vsub.f32 %v84, %v659
    %v672 = vsub.f32 %v85, %v659
    %v673 = vsub.f32 %v86, %v659
    %v674 = vsub.f32 %v87, %v659
    %v675 = vsub.f32 %v88, %v659
    %v676 = vsub.f32 %v89, %v659
    %v677 = vmul.f32 %v661, 1.442695
    %v678 = vpow.pop %v677
    %v679 = vmul.f32 %v662, 1.442695
    %v680 = vpow.pop %v679
    %v681 = vmul.f32 %v663, 1.442695
    %v682 = vpow.pop %v681
    %v683 = vmul.f32 %v664, 1.442695
    %v684 = vpow.pop %v683
    %v685 = vmul.f32 %v665, 1.442695
    %v686 = vpow.pop %v685
    %v687 = vmul.f32 %v666, 1.442695
    %v688 = vpow.pop %v687
    %v689 = vmul.f32 %v667, 1.442695
    %v690 = vpow.pop %v689
    %v691 = vmul.f32 %v668, 1.442695
    %v692 = vpow.pop %v691
    %v693 = vmul.f32 %v669, 1.442695
    %v694 = vpow.pop %v693
    %v695 = vmul.f32 %v670, 1.442695
    %v696 = vpow.pop %v695
    %v697 = vmul.f32 %v671, 1.442695
    %v698 = vpow.pop %v697
    %v699 = vmul.f32 %v672, 1.442695
    %v700 = vpow.pop %v699
    %v701 = vmul.f32 %v673, 1.442695
    %v702 = vpow.pop %v701
    %v703 = vmul.f32 %v674, 1.442695
    %v704 = vpow.pop %v703
    %v705 = vmul.f32 %v675, 1.442695
    %v706 = vpow.pop %v705
    %v707 = vmul.f32 %v676, 1.442695
    %v708 = vpow.pop %v707
    %v709 = vld [vmem:[#allocation5] sm:$0x1]
    %v710 = vsub.f32 %v632, %v654
    %v711 = vmul.f32 %v710, 1.442695
    %v712 = vpow.pop %v711
    %v713 = vmul.f32 %v709, %v712
    %v714 = vadd.f32 %v678, %v680
    %v715 = vadd.f32 %v714, %v682
    %v716 = vadd.f32 %v715, %v684
    %v717 = vadd.f32 %v716, %v686
    %v718 = vadd.f32 %v717, %v688
    %v719 = vadd.f32 %v718, %v690
    %v720 = vadd.f32 %v719, %v692
    %v721 = vadd.f32 %v720, %v694
    %v722 = vadd.f32 %v721, %v696
    %v723 = vadd.f32 %v722, %v698
    %v724 = vadd.f32 %v723, %v700
    %v725 = vadd.f32 %v724, %v702
    %v726 = vadd.f32 %v725, %v704
    %v727 = vadd.f32 %v726, %v706
    %v728 = vadd.f32 %v727, %v708
    %v729 = vrot.slane %v728, 4
    %v730 = vadd.f32 %v728, %v729
    %v731 = vrot.slane %v730, 2
    %v732 = vadd.f32 %v730, %v731
    %v733 = vrot.slane %v732, 1
    %v734 = vadd.f32 %v732, %v733
    %v735 = vadd.f32 %v713, %v734
    %736 = vst [vmem:[#allocation4] sm:$0x1] %v654
    %737 = vst [vmem:[#allocation5] sm:$0x1] %v735
    // Predicated region
    $region26: #{tpu_custom_call.1} parent=1 // pred_check
      %p738 = pneg %p24
    $region27: #{tpu_custom_call.1} parent=1 // pred_check_branch
      %740 = sbr.rel (%p738) target = $region29
    $region28: #{tpu_custom_call.1} parent=1 // pred_region
      %v741 = vld [vmem:[#allocation2] sm:$0xff]
      %v742 = vld [vmem:[#allocation2 + $0x8] sm:$0xff]
      %v743 = vld [vmem:[#allocation2 + $0x10] sm:$0xff]
      %v744 = vld [vmem:[#allocation2 + $0x18] sm:$0xff]
      %v745 = vld [vmem:[#allocation2 + $0x20] sm:$0xff]
      %v746 = vld [vmem:[#allocation2 + $0x28] sm:$0xff]
      %v747 = vld [vmem:[#allocation2 + $0x30] sm:$0xff]
      %v748 = vld [vmem:[#allocation2 + $0x38] sm:$0xff]
      %v749 = vld [vmem:[#allocation2 + $0x40] sm:$0xff]
      %v750 = vld [vmem:[#allocation2 + $0x48] sm:$0xff]
      %v751 = vld [vmem:[#allocation2 + $0x50] sm:$0xff]
      %v752 = vld [vmem:[#allocation2 + $0x58] sm:$0xff]
      %v753 = vld [vmem:[#allocation2 + $0x60] sm:$0xff]
      %v754 = vld [vmem:[#allocation2 + $0x68] sm:$0xff]
      %v755 = vld [vmem:[#allocation2 + $0x70] sm:$0xff]
      %v756 = vld [vmem:[#allocation2 + $0x78] sm:$0xff]
      %v757 = vld [vmem:[#allocation3] sm:$0xff]
      %v758 = vld [vmem:[#allocation3 + $0x8] sm:$0xff]
      %v759 = vld [vmem:[#allocation3 + $0x10] sm:$0xff]
      %v760 = vld [vmem:[#allocation3 + $0x18] sm:$0xff]
      %v761 = vld [vmem:[#allocation3 + $0x20] sm:$0xff]
      %v762 = vld [vmem:[#allocation3 + $0x28] sm:$0xff]
      %v763 = vld [vmem:[#allocation3 + $0x30] sm:$0xff]
      %v764 = vld [vmem:[#allocation3 + $0x38] sm:$0xff]
      %v765 = vld [vmem:[#allocation3 + $0x40] sm:$0xff]
      %v766 = vld [vmem:[#allocation3 + $0x48] sm:$0xff]
      %v767 = vld [vmem:[#allocation3 + $0x50] sm:$0xff]
      %v768 = vld [vmem:[#allocation3 + $0x58] sm:$0xff]
      %v769 = vld [vmem:[#allocation3 + $0x60] sm:$0xff]
      %v770 = vld [vmem:[#allocation3 + $0x68] sm:$0xff]
      %v771 = vld [vmem:[#allocation3 + $0x70] sm:$0xff]
      %v772 = vld [vmem:[#allocation3 + $0x78] sm:$0xff]
      %v773 = vlog2.pop %v757
      %v774 = vmul.f32 %v773, 0.6931472
      %v775 = vlog2.pop %v758
      %v776 = vmul.f32 %v775, 0.6931472
      %v777 = vlog2.pop %v759
      %v778 = vmul.f32 %v777, 0.6931472
      %v779 = vlog2.pop %v760
      %v780 = vmul.f32 %v779, 0.6931472
      %v781 = vlog2.pop %v761
      %v782 = vmul.f32 %v781, 0.6931472
      %v783 = vlog2.pop %v762
      %v784 = vmul.f32 %v783, 0.6931472
      %v785 = vlog2.pop %v763
      %v786 = vmul.f32 %v785, 0.6931472
      %v787 = vlog2.pop %v764
      %v788 = vmul.f32 %v787, 0.6931472
      %v789 = vlog2.pop %v765
      %v790 = vmul.f32 %v789, 0.6931472
      %v791 = vlog2.pop %v766
      %v792 = vmul.f32 %v791, 0.6931472
      %v793 = vlog2.pop %v767
      %v794 = vmul.f32 %v793, 0.6931472
      %v795 = vlog2.pop %v768
      %v796 = vmul.f32 %v795, 0.6931472
      %v797 = vlog2.pop %v769
      %v798 = vmul.f32 %v797, 0.6931472
      %v799 = vlog2.pop %v770
      %v800 = vmul.f32 %v799, 0.6931472
      %v801 = vlog2.pop %v771
      %v802 = vmul.f32 %v801, 0.6931472
      %v803 = vlog2.pop %v772
      %v804 = vmul.f32 %v803, 0.6931472
      %v805 = vadd.f32 %v741, %v774
      %v806 = vadd.f32 %v742, %v776
      %v807 = vadd.f32 %v743, %v778
      %v808 = vadd.f32 %v744, %v780
      %v809 = vadd.f32 %v745, %v782
      %v810 = vadd.f32 %v746, %v784
      %v811 = vadd.f32 %v747, %v786
      %v812 = vadd.f32 %v748, %v788
      %v813 = vadd.f32 %v749, %v790
      %v814 = vadd.f32 %v750, %v792
      %v815 = vadd.f32 %v751, %v794
      %v816 = vadd.f32 %v752, %v796
      %v817 = vadd.f32 %v753, %v798
      %v818 = vadd.f32 %v754, %v800
      %v819 = vadd.f32 %v755, %v802
      %v820 = vadd.f32 %v756, %v804
      %v821 = vlaneseq
      %v822 = vshrl.u32 %v821, 7
      %v823 = vadd.s32 %v822, 8
      %v824 = vadd.s32 %v822, 16
      %v825 = vadd.s32 %v822, 24
      %v826 = vadd.s32 %v822, 32
      %v827 = vadd.s32 %v822, 40
      %v828 = vadd.s32 %v822, 48
      %v829 = vadd.s32 %v822, 56
      %v830 = vadd.s32 %v822, 64
      %v831 = vadd.s32 %v822, 72
      %v832 = vadd.s32 %v822, 80
      %v833 = vadd.s32 %v822, 88
      %v834 = vadd.s32 %v822, 96
      %v835 = vadd.s32 %v822, 104
      %v836 = vadd.s32 %v822, 112
      %v837 = vadd.s32 %v822, 120
      %v838 = vstv %s90
      %v839 = vadd.s32 %v822, %v838
      %v840 = vadd.s32 %v823, %v838
      %v841 = vadd.s32 %v824, %v838
      %v842 = vadd.s32 %v825, %v838
      %v843 = vadd.s32 %v826, %v838
      %v844 = vadd.s32 %v827, %v838
      %v845 = vadd.s32 %v828, %v838
      %v846 = vadd.s32 %v829, %v838
      %v847 = vadd.s32 %v830, %v838
      %v848 = vadd.s32 %v831, %v838
      %v849 = vadd.s32 %v832, %v838
      %v850 = vadd.s32 %v833, %v838
      %v851 = vadd.s32 %v834, %v838
      %v852 = vadd.s32 %v835, %v838
      %v853 = vadd.s32 %v836, %v838
      %v854 = vadd.s32 %v837, %v838
      %vm855 = vcmp.lt.s32.totalorder %v839, 16
      %vm856 = vcmp.lt.s32.totalorder %v840, 16
      %vm857 = vcmp.lt.s32.totalorder %v841, 16
      %vm858 = vcmp.lt.s32.totalorder %v842, 16
      %vm859 = vcmp.lt.s32.totalorder %v843, 16
      %vm860 = vcmp.lt.s32.totalorder %v844, 16
      %vm861 = vcmp.lt.s32.totalorder %v845, 16
      %vm862 = vcmp.lt.s32.totalorder %v846, 16
      %vm863 = vcmp.lt.s32.totalorder %v847, 16
      %vm864 = vcmp.lt.s32.totalorder %v848, 16
      %vm865 = vcmp.lt.s32.totalorder %v849, 16
      %vm866 = vcmp.lt.s32.totalorder %v850, 16
      %vm867 = vcmp.lt.s32.totalorder %v851, 16
      %vm868 = vcmp.lt.s32.totalorder %v852, 16
      %vm869 = vcmp.lt.s32.totalorder %v853, 16
      %vm870 = vcmp.lt.s32.totalorder %v854, 16
      %v871 = vsel %vm855, %v805, 0.0
      %v872 = vsel %vm856, %v806, 0.0
      %v873 = vsel %vm857, %v807, 0.0
      %v874 = vsel %vm858, %v808, 0.0
      %v875 = vsel %vm859, %v809, 0.0
      %v876 = vsel %vm860, %v810, 0.0
      %v877 = vsel %vm861, %v811, 0.0
      %v878 = vsel %vm862, %v812, 0.0
      %v879 = vsel %vm863, %v813, 0.0
      %v880 = vsel %vm864, %v814, 0.0
      %v881 = vsel %vm865, %v815, 0.0
      %v882 = vsel %vm866, %v816, 0.0
      %v883 = vsel %vm867, %v817, 0.0
      %v884 = vsel %vm868, %v818, 0.0
      %v885 = vsel %vm869, %v819, 0.0
      %v886 = vsel %vm870, %v820, 0.0
      %v887 = vld [vmem:[#allocation6] sm:$0x1]
      %v888 = vsel %vm599, %v871, 0.0
      %v889 = vsel %vm599, %v872, 0.0
      %v890 = vadd.f32 %v888, %v889
      %v891 = vsel %vm599, %v873, 0.0
      %v892 = vadd.f32 %v890, %v891
      %v893 = vsel %vm599, %v874, 0.0
      %v894 = vadd.f32 %v892, %v893
      %v895 = vsel %vm599, %v875, 0.0
      %v896 = vadd.f32 %v894, %v895
      %v897 = vsel %vm599, %v876, 0.0
      %v898 = vadd.f32 %v896, %v897
      %v899 = vsel %vm599, %v877, 0.0
      %v900 = vadd.f32 %v898, %v899
      %v901 = vsel %vm599, %v878, 0.0
      %v902 = vadd.f32 %v900, %v901
      %v903 = vsel %vm599, %v879, 0.0
      %v904 = vadd.f32 %v902, %v903
      %v905 = vsel %vm599, %v880, 0.0
      %v906 = vadd.f32 %v904, %v905
      %v907 = vsel %vm599, %v881, 0.0
      %v908 = vadd.f32 %v906, %v907
      %v909 = vsel %vm599, %v882, 0.0
      %v910 = vadd.f32 %v908, %v909
      %v911 = vsel %vm599, %v883, 0.0
      %v912 = vadd.f32 %v910, %v911
      %v913 = vsel %vm599, %v884, 0.0
      %v914 = vadd.f32 %v912, %v913
      %v915 = vsel %vm599, %v885, 0.0
      %v916 = vadd.f32 %v914, %v915
      %v917 = vsel %vm599, %v886, 0.0
      %v918 = vadd.f32 %v916, %v917
      %919 = vadd.xlane.f32.xlu0 %v918
      %v920 = vpop.xlane.xlu0 %919
      %v921 = vrot.slane %v920, 4
      %v922 = vadd.f32 %v920, %v921
      %v923 = vrot.slane %v922, 2
      %v924 = vadd.f32 %v922, %v923
      %v925 = vrot.slane %v924, 1
      %v926 = vadd.f32 %v924, %v925
      %s927 = vtos %v926
      %v928 = vstv %s927
      %v929 = vadd.f32 %v887, %v928
      %vm930 = vcmask 0
      %931 = vst.msk [vmem:[#allocation6] sm:$0x1] %vm930, %v929
    $region29: #{tpu_custom_call.1} parent=1 // pred_fallthru
      _
    // Predicated region
    $region30: #{tpu_custom_call.1} parent=1 // pred_check
      %p932 = pneg %p23
    $region31: #{tpu_custom_call.1} parent=1 // pred_check_branch
      %934 = sbr.rel (%p932) target = $region33
    $region32: #{tpu_custom_call.1} parent=1 // pred_region
      %v935 = vlog2.pop %v735
      %v936 = vmul.f32 %v935, 0.6931472
      %v937 = vadd.f32 %v654, %v936
      %v938 = vlaneseq
      %v939 = vand.u32 %v938, 127
      %v940 = vstv %s91
      %v941 = vadd.s32 %v939, %v940
      %vm942 = vcmp.lt.s32.totalorder %v941, 16
      %v943 = vsel %vm942, %v937, 0.0
      %v944 = vld [vmem:[#allocation7] sm:$0x1]
      %vm945 = vcmask 1040384
      %v946 = vsel %vm945, %v943, 0.0
      %947 = vadd.xlane.f32.xlu0 %v946
      %v948 = vpop.xlane.xlu0 %947
      %v949 = vrot.slane %v948, 4
      %v950 = vadd.f32 %v948, %v949
      %v951 = vrot.slane %v950, 2
      %v952 = vadd.f32 %v950, %v951
      %v953 = vrot.slane %v952, 1
      %v954 = vadd.f32 %v952, %v953
      %s955 = vtos %v954
      %v956 = vstv %s955
      %v957 = vadd.f32 %v944, %v956
      %vm958 = vcmask 0
      %959 = vst.msk [vmem:[#allocation7] sm:$0x1] %vm958, %v957
    $region33: #{tpu_custom_call.1} parent=1 // pred_fallthru
      _
    // Predicated region
    $region34: #{tpu_custom_call.1} parent=1 // pred_check
      _
    $region35: #{tpu_custom_call.1} parent=1 // pred_check_branch
      %961 = sbr.rel (%p25) target = $region37
    $region36: #{tpu_custom_call.1} parent=1 // pred_region
      %v962 = vld [vmem:[#allocation6] sm:$0x1]
      %v963 = vld [vmem:[#allocation7] sm:$0x1]
      %v964 = vadd.f32 %v962, %v963
      %v965 = vmul.f32 %v964, 0.5
      %v966 = vld [vmem:[#allocation8] sm:$0x1]
      %v967 = vsub.f32 %v965, %v966
      %v968 = vmul.f32 %v967, 0.0625
      %vm969 = vcmask 0
      %970 = vst.msk [vmem:[#allocation12] sm:$0x1] %vm969, %v968
    $region37: #{tpu_custom_call.1} parent=1 // pred_fallthru
      _
    // Predicated region
    $region38: #{tpu_custom_call.1} parent=1 // pred_check
      _
    $region39: #{tpu_custom_call.1} parent=1 // pred_check_branch
      %972 = sbr.rel (0) target = $region41
    $region40: #{tpu_custom_call.1} parent=1 // pred_region
      %s974 = ssub.s32 16, 16
      %975 = vsyncadd [#allocation11], %s974
      %s977 = sshll.u32 [#allocation12], 4
      %s978 = int_to_ptr.vmem [resolvable:$true] %s977
      %980 = dma.vmem_to_hbm [thread:$0]  %s978, 16, %s1, [#allocation11]
    $region41: #{tpu_custom_call.1} parent=1 // pred_fallthru
      _
    // Predicated region
    $region42: #{tpu_custom_call.1} parent=1 // pred_check
      _
    $region43: #{tpu_custom_call.1} parent=1 // pred_check_branch
      %982 = sbr.rel (0) target = $region45
    $region44: #{tpu_custom_call.1} parent=1 // pred_region
      %983 = dma.done [#allocation11], 16
    $region45: #{tpu_custom_call.1} parent=1 // pred_fallthru
      _
    %984 = vsyncpa [#allocation10], 1
    %985 = vsyncpa [#allocation11], 1

</llo_original>
